<compile_context>
chip_gen: v7x
topology: tpu7x:2x2x1
jax: 0.10.0
libtpu: 0.0.40
codegen_flags: <defaults>
</compile_context>

<pallas_src>
import jax
import jax.numpy as jnp
from jax.experimental import pallas as pl
from jax.experimental.pallas import tpu as pltpu


_MAX_CHUNKS = 4
_MIN_CHUNK_BYTES = 4 * 1024 * 1024  # only split when each chunk is >= 4 MiB


def _make_identity_dma_kernel(chunk_bounds):
    """Build a kernel copying x -> o via raw HBM->HBM DMAs.

    chunk_bounds: static tuple of (start, size) pairs along axis 0.
    """

    def kernel(x_ref, o_ref, sems):
        copies = []
        for c, (start, size) in enumerate(chunk_bounds):
            cp = pltpu.make_async_copy(
                x_ref.at[pl.ds(start, size)],
                o_ref.at[pl.ds(start, size)],
                sems.at[c],
            )
            cp.start()
            copies.append(cp)
        # Wait only after all starts so the chunk DMAs overlap each other.
        for cp in copies:
            cp.wait()

    return kernel


def _prompt_forward_impl(t):
    """Identity forward pass (Prompt.forward) as a Pallas HBM->HBM DMA copy."""
    if t.size == 0:
        # Nothing to copy; identity is trivially the input.
        return t

    orig_shape = t.shape
    # 0-d -> (1,) so the DMA / axis-0 chunking has a leading axis (bitcast
    # under jit); restored at the end.
    x = t.reshape(1) if t.ndim == 0 else t

    leading = x.shape[0]
    itemsize = jnp.dtype(x.dtype).itemsize
    total_bytes = int(x.size) * int(itemsize)

    # Chunk along axis 0 only when each chunk moves enough bytes to be worth
    # an extra outstanding DMA; otherwise a single full-array DMA.
    num_chunks = int(
        min(_MAX_CHUNKS, leading, max(1, total_bytes // _MIN_CHUNK_BYTES))
    )
    base = leading // num_chunks
    rem = leading % num_chunks
    chunk_bounds = []
    start = 0
    for c in range(num_chunks):
        size = base + (1 if c < rem else 0)
        chunk_bounds.append((start, size))
        start += size
    chunk_bounds = tuple(chunk_bounds)

    out = pl.pallas_call(
        _make_identity_dma_kernel(chunk_bounds),
        out_shape=jax.ShapeDtypeStruct(x.shape, x.dtype),
        in_specs=[pl.BlockSpec(memory_space=pl.ANY)],
        out_specs=pl.BlockSpec(memory_space=pl.ANY),
        scratch_shapes=[pltpu.SemaphoreType.DMA((num_chunks,))],
        cost_estimate=pl.CostEstimate(
            flops=0, transcendentals=0, bytes_accessed=2 * total_bytes
        ),
    )(x)

    return out.reshape(orig_shape)


# jit so shape-dependent chunking decisions are cached per shape/dtype and the
# (rare) 0-d reshape plumbing is a bitcast.
prompt_forward = jax.jit(_prompt_forward_impl)


if __name__ == "__main__":
    key = jax.random.PRNGKey(0)
    # Small NCHW-shaped input, consistent with typical module usage.
    x = jax.random.normal(key, (2, 4, 16, 16), dtype=jnp.float32)

    y = prompt_forward(x)
    jax.block_until_ready(y)

    assert y.shape == x.shape, (y.shape, x.shape)
    assert y.dtype == x.dtype, (y.dtype, x.dtype)
    assert bool(jnp.all(y == x)), "identity mismatch"

    print("KERNEL_OK")
</pallas_src>

<mosaic_0001>
module attributes {stable_mosaic.version = 11 : i64} {
  func.func @kernel(%arg0: memref<2x4x16x16xf32, #tpu.memory_space<any>>, %arg1: memref<2x4x16x16xf32, #tpu.memory_space<any>>, %arg2: memref<1x!tpu.dma_semaphore, #tpu.memory_space<semaphore_mem>>) attributes {dimension_semantics = [], scalar_prefetch = 0 : i64, scratch_operands = 1 : i64, tpu.core_type = #tpu.core_type<tc>} {
    %c0_i32 = arith.constant 0 : i32
    %c0_i32_0 = arith.constant 0 : i32
    %c0_i32_1 = arith.constant 0 : i32
    %c0_i32_2 = arith.constant 0 : i32
    %c0_i32_3 = arith.constant 0 : i32
    %0 = tpu.memref_slice %arg0[%c0_i32_0, %c0_i32_1, %c0_i32_2, %c0_i32_3] : memref<2x4x16x16xf32, #tpu.memory_space<any>> -> memref<2x4x16x16xf32, #tpu.memory_space<any>>
    %c0_i32_4 = arith.constant 0 : i32
    %c0_i32_5 = arith.constant 0 : i32
    %c0_i32_6 = arith.constant 0 : i32
    %c0_i32_7 = arith.constant 0 : i32
    %1 = tpu.memref_slice %arg1[%c0_i32_4, %c0_i32_5, %c0_i32_6, %c0_i32_7] : memref<2x4x16x16xf32, #tpu.memory_space<any>> -> memref<2x4x16x16xf32, #tpu.memory_space<any>>
    %2 = tpu.memref_slice %arg2[%c0_i32] : memref<1x!tpu.dma_semaphore, #tpu.memory_space<semaphore_mem>> -> memref<1x!tpu.dma_semaphore, #tpu.memory_space<semaphore_mem>>
    %3 = tpu.memref_squeeze %2 : memref<1x!tpu.dma_semaphore, #tpu.memory_space<semaphore_mem>> -> memref<!tpu.dma_semaphore, #tpu.memory_space<semaphore_mem>>
    tpu.enqueue_dma source(%0 : memref<2x4x16x16xf32, #tpu.memory_space<any>>) target(%1 : memref<2x4x16x16xf32, #tpu.memory_space<any>>) target_semaphore(%3 : memref<!tpu.dma_semaphore, #tpu.memory_space<semaphore_mem>>)
    %c0_i32_8 = arith.constant 0 : i32
    %c0_i32_9 = arith.constant 0 : i32
    %c0_i32_10 = arith.constant 0 : i32
    %c0_i32_11 = arith.constant 0 : i32
    %c0_i32_12 = arith.constant 0 : i32
    %4 = tpu.memref_slice %arg0[%c0_i32_9, %c0_i32_10, %c0_i32_11, %c0_i32_12] : memref<2x4x16x16xf32, #tpu.memory_space<any>> -> memref<2x4x16x16xf32, #tpu.memory_space<any>>
    %c0_i32_13 = arith.constant 0 : i32
    %c0_i32_14 = arith.constant 0 : i32
    %c0_i32_15 = arith.constant 0 : i32
    %c0_i32_16 = arith.constant 0 : i32
    %5 = tpu.memref_slice %arg1[%c0_i32_13, %c0_i32_14, %c0_i32_15, %c0_i32_16] : memref<2x4x16x16xf32, #tpu.memory_space<any>> -> memref<2x4x16x16xf32, #tpu.memory_space<any>>
    %6 = tpu.memref_slice %arg2[%c0_i32_8] : memref<1x!tpu.dma_semaphore, #tpu.memory_space<semaphore_mem>> -> memref<1x!tpu.dma_semaphore, #tpu.memory_space<semaphore_mem>>
    %7 = tpu.memref_squeeze %6 : memref<1x!tpu.dma_semaphore, #tpu.memory_space<semaphore_mem>> -> memref<!tpu.dma_semaphore, #tpu.memory_space<semaphore_mem>>
    tpu.wait_dma2 semaphore(%7 : memref<!tpu.dma_semaphore, #tpu.memory_space<semaphore_mem>>) src(%4 : memref<2x4x16x16xf32, #tpu.memory_space<any>>) dst(%5 : memref<2x4x16x16xf32, #tpu.memory_space<any>>)
    return
  }
}

</mosaic_0001>

<llo_original>
// kernel: _prompt_forward_impl.1
$region0: #{_prompt_forward_impl.1}
  #allocation0 [shape = 'u32[]', space=smem, size = 0x4, offset = 0x4, fixed_abs, tag = 'smem constant byte address 0x4 - core index']
  #allocation1 [shape = 'u32[144,128]{1,0:T(1,128)}', space=vmem, size = 0x12000, scoped, tag = 'internal scratch']
  #allocation2 [shape = 's32[1]{0}', space=sflag, size = 0x4, scoped, tag = 'scratch operand']
  #allocation3 [shape = 's32[]', space=sflag, size = 0x4, offset = 0, fixed_abs, tag = 'sflag constant byte address 0x0 - dummy sync flag']
  #allocation4 [shape = 'u32[0]{0}', space=smem, size = 0, offset = 0, fixed_abs, tag = 'smem constant byte address 0x0 - null']
  %s0 = inlined_call_operand.hbm [shape: f32[2,4,16,16], index: 0, kind: input, shape index: {}]
  %s1 = inlined_call_operand.hbm [shape: f32[2,4,16,16], index: 1, kind: output, shape index: {}]
  %s2 = sld [smem:[#allocation0]]
  $region2: #{_prompt_forward_impl.1} parent=0
    _
  %s4 = ssub.s32 1, %s2
  %s5 = scalar_select 0, %s4, %s2
  %s7 = sshll.u32 1, 14
  %s8 = sxor.u32 4294967295, %s7
  %s11 = sshll.u32 3, 24
  %s12 = sxor.u32 4294967295, %s11
  %s13 = sand.u32 0, %s12
  %s15 = sor.u32 %s13, 0
  %18 = dma.general %s0, 2048, %s1, [#allocation2], [#allocation3], [#allocation4], %s15, 0
  %s19 = smul.u32 2, 4
  %s20 = smul.u32 %s19, 16
  %s21 = smul.u32 %s20, 1
  %s22 = sshll.u32 %s21, 4
  %23 = dma.done [#allocation2], %s22
  %24 = vsyncmov [#allocation2]
  %s25 = vpop.sfrf %24
  %p26 = scmp.eq.s32.totalorder %s25, 0
  %p27 = pneg %p26
  %29 = shalt.err (%p27)

</llo_original>
